<compile_context>
chip_gen: v7x
topology: tpu7x:2x2x1
jax: 0.10.0
libtpu: 0.0.40
codegen_flags: <defaults>
</compile_context>

<pallas_src>
import numpy as np
import jax
import jax.numpy as jnp
from jax.experimental import pallas as pl
from jax.experimental.pallas import tpu as pltpu


def _round_up(x, m):
    return (x + m - 1) // m * m


def _make_kernel(chunks, tq, hdvp, use_bf16_exp):
    f32 = jnp.float32

    def kernel(q_ref, wl_ref, kf_ref, vcat_ref, wwv_ref, obias_ref, o_ref, qc_ref):
        kf = kf_ref[0]            # [H*Dk, Lk]  bf16, resident across q-tiles
        vcat = vcat_ref[0]        # [Lk, HDvp]  bf16, resident across q-tiles
        q_tile = q_ref[0]         # [tq, H*Dk]  bf16 (streamed once, no Hh replication)
        acc = jnp.zeros((tq, hdvp), f32)

        gbase = 0
        for gc in chunks:                               # static chunk sizes, e.g. (4, 4)
            rows = gc * tq
            # fc_l folded into Q on the VPU: chunk row-block j is q * (scale*wl[g]).
            for j in range(gc):
                qg = q_tile * wl_ref[gbase + j:gbase + j + 1, :]     # bf16*f32 -> f32
                qc_ref[pl.ds(j * tq, tq), :] = qg.astype(qc_ref.dtype)
            # ONE chunk-batched QK^T matmul: [gc*tq, H*Dk] @ [H*Dk, Lk].
            s = jnp.dot(qc_ref[pl.ds(0, rows), :], kf, preferred_element_type=f32)
            m = jnp.max(s, axis=-1, keepdims=True)
            if use_bf16_exp:
                # v6e/v7x: bf16 EUP doubles exp throughput; reductions stay f32.
                e = jnp.exp((s - m).astype(jnp.bfloat16))
                z = jnp.sum(e.astype(f32), axis=-1, keepdims=True)
            else:
                # v5e (and unknown chips): f32 softmax path (no bf16 EUP/VPU).
                e32 = jnp.exp(s - m)
                z = jnp.sum(e32, axis=-1, keepdims=True)
                e = e32.astype(jnp.bfloat16)
            r = pl.reciprocal(z, approx=True)           # softmax denominator on the EUP slot
            # ONE chunk-batched PV matmul: [gc*tq, Lk] @ [Lk, HDvp].
            pv = jnp.dot(e, vcat, preferred_element_type=f32)
            # fc_w weight and the 1/z normalization folded into a small per-g scale.
            for j in range(gc):
                g = gbase + j
                acc = acc + pv[j * tq:(j + 1) * tq, :] * (
                    r[j * tq:(j + 1) * tq, :] * wwv_ref[g:g + 1, :])
            gbase += gc

        # fc_w bias folded into bw[h] * colsum(V_h), precomputed exactly in f32.
        o_ref[0] = (acc + obias_ref[0]).astype(o_ref.dtype)

    return kernel


def add_dot_product_attention(q, k, v, attn_bias, params, dim_key, n_head, n_head_h):
    """Pallas implementation of AddDotProductAttention.forward (dropout off)."""
    wl, bl, ww, bw = params
    B, H, Lq, Dk = q.shape
    Lk = k.shape[2]
    Dv = v.shape[3]
    assert H == n_head
    scale = float(dim_key) ** (-0.5)
    Hh = n_head_h
    HDk, HDv = H * Dk, H * Dv
    HDvp = _round_up(HDv, 128)          # lane-dense (unmasked) output stores
    f32, bf16 = jnp.float32, jnp.bfloat16

    # attn_bias (shape [B,H,Lq]) and fc_l's bias bl are constant along the key axis,
    # so they cancel exactly inside the softmax -> dropped (no DMA, no VPU adds).
    del attn_bias, bl

    wl32, ww32, bw32 = wl.astype(f32), ww.astype(f32), bw.astype(f32)

    # ---- wrapper-side folding (small, no Hh x replication of Q) -------------------
    # Q flattened once: q_flat[b, q, h*Dk+d] = q[b,h,q,d].
    q_flat = jnp.transpose(q, (0, 2, 1, 3)).reshape(B, Lq, HDk).astype(bf16)
    # Lane-expanded fc_l weight: wl_rep[g, h*Dk+d] = scale * wl[g, h].
    wl_rep = scale * jnp.repeat(wl32, Dk, axis=1)                      # [Hh, H*Dk] f32
    # K pre-transposed to the MXU-native [contraction, keys] layout.
    kf = jnp.transpose(k, (0, 1, 3, 2)).reshape(B, HDk, Lk).astype(bf16)
    # V with heads concatenated on the lane axis, padded to a 128-lane multiple.
    vcat = jnp.transpose(v, (0, 2, 1, 3)).reshape(B, Lk, HDv)
    # fc_w weight broadcast over the Dv lanes of each head: wwv[g, h*Dv+d] = ww[h, g].
    wwv = jnp.repeat(ww32.T, Dv, axis=1)                               # [Hh, H*Dv] f32
    # fc_w bias:  (W + bw) @ V == W @ V + bw * colsum(V)   (exact, f32).
    obias = (bw32[None, :, None] * jnp.sum(v.astype(f32), axis=2)).reshape(B, 1, HDv)
    if HDvp != HDv:
        pad = HDvp - HDv
        vcat = jnp.pad(vcat, ((0, 0), (0, 0), (0, pad)))
        wwv = jnp.pad(wwv, ((0, 0), (0, pad)))
        obias = jnp.pad(obias, ((0, 0), (0, 0), (0, pad)))
    vcat = vcat.astype(bf16)

    # ---- generation-aware tiling ---------------------------------------------------
    kind = ""
    try:
        kind = jax.devices()[0].device_kind.lower()
    except Exception:
        pass
    is_v7 = ("v7" in kind) or ("7x" in kind) or ("tpu7" in kind)
    is_v6 = "v6" in kind
    use_bf16_exp = is_v6 or is_v7
    cap = (4 << 20) if is_v7 else ((16 << 20) if is_v6 else (8 << 20))  # softmax tile budget

    tq = 128 if Lq >= 128 else _round_up(Lq, 8)
    if is_v6 and Lq >= 256 and 256 * Lk * 4 <= cap:
        tq = 256                                       # v6e: 128 MiB VMEM, 256-row MXU
    while tq > 8 and tq * Lk * 4 > cap:
        tq = max(8, _round_up(tq // 2, 8))
    Lq_pad = _round_up(Lq, tq)
    if Lq_pad != Lq:
        q_flat = jnp.pad(q_flat, ((0, 0), (0, Lq_pad - Lq), (0, 0)))
    n_qt = Lq_pad // tq

    # Hidden-head chunk size: batch Gc heads into one matmul pair per chunk.
    gc_cap = 2 if is_v7 else 4
    Gc = int(max(1, min(gc_cap, Hh, cap // max(1, tq * Lk * 4))))
    chunks, rem = [], Hh
    while rem > 0:
        c = min(Gc, rem)
        chunks.append(c)
        rem -= c
    chunks = tuple(chunks)

    kernel = _make_kernel(chunks, tq, HDvp, use_bf16_exp)

    # ---- VMEM budget (double-buffer every BlockSpec stream; K/V counted 2x too) ----
    out_isize = q.dtype.itemsize
    resident = 2 * (HDk * Lk + Lk * HDvp) * 2                      # bf16 K / V_cat, 2-buffered
    stream = 2 * (tq * HDk * 2 + tq * HDvp * out_isize)            # q tile + out tile, 2-buffered
    small = (Hh * (HDk + HDvp) + 2 * HDvp) * 4 * 2
    soft = Gc * tq * (Lk * (4 + 4 + 2) + HDvp * 4) + tq * HDvp * 4 # s, s-m, e, pv, acc
    scratch = Gc * tq * HDk * 2
    est = resident + stream + small + 2 * soft + scratch
    compiler_kwargs = dict(dimension_semantics=("parallel", "parallel"))
    if est > (12 << 20):
        try:
            vmem_cap = pltpu.get_tpu_info().vmem_capacity_bytes
        except Exception:
            vmem_cap = 64 << 20
        compiler_kwargs["vmem_limit_bytes"] = int(
            min(max(2 * est, 32 << 20), vmem_cap * 3 // 4))

    out = pl.pallas_call(
        kernel,
        out_shape=jax.ShapeDtypeStruct((B, Lq_pad, HDvp), q.dtype),
        grid_spec=pltpu.PrefetchScalarGridSpec(
            num_scalar_prefetch=0,
            grid=(B, n_qt),
            in_specs=[
                pl.BlockSpec((1, tq, HDk), lambda b, i: (b, i, 0)),     # Q tile (no replication)
                pl.BlockSpec((Hh, HDk), lambda b, i: (0, 0)),           # scale*wl, lane-expanded
                pl.BlockSpec((1, HDk, Lk), lambda b, i: (b, 0, 0)),     # K^T (resident over i)
                pl.BlockSpec((1, Lk, HDvp), lambda b, i: (b, 0, 0)),    # V_cat (resident over i)
                pl.BlockSpec((Hh, HDvp), lambda b, i: (0, 0)),          # folded fc_w weight
                pl.BlockSpec((1, 1, HDvp), lambda b, i: (b, 0, 0)),     # folded fc_w bias
            ],
            out_specs=pl.BlockSpec((1, tq, HDvp), lambda b, i: (b, i, 0)),  # 128-lane-dense out
            scratch_shapes=[pltpu.VMEM((Gc * tq, HDk), bf16)],          # chunk-batched Q
        ),
        compiler_params=pltpu.CompilerParams(**compiler_kwargs),
    )(q_flat, wl_rep, kf, vcat, wwv, obias)

    out = out[:, :Lq, :HDv].reshape(B, Lq, H, Dv)
    return jnp.transpose(out, (0, 2, 1, 3))       # back to the module's [B, H, Lq, Dv]


def reference(q, k, v, attn_bias, wl, bl, ww, bw, dim_key):
    """Pure-JAX transcription of the PyTorch forward (dropout off)."""
    scaled_q = dim_key ** (-0.5) * q
    product = jnp.einsum('bhqd,bhkd->bhqk', scaled_q, k)
    product = jnp.transpose(product, (0, 2, 3, 1))           # [B, Lq, Lk, H]
    if attn_bias is not None:
        product = product + jnp.transpose(attn_bias, (0, 2, 1))[:, :, None, :]
    product = product @ wl.T + bl                            # fc_l -> [B, Lq, Lk, Hh]
    weights = jax.nn.softmax(product, axis=2)                # softmax over keys
    weights = weights @ ww.T + bw                            # fc_w -> [B, Lq, Lk, H]
    weights = jnp.transpose(weights, (0, 3, 1, 2))           # [B, H, Lq, Lk]
    return jnp.einsum('bhqk,bhkd->bhqd', weights, v)


if __name__ == "__main__":
    # Module config (dropout_rate=0.0 => dropout branch is a no-op, matching eval).
    dim_key, n_head, n_head_h = 16, 4, 8
    B, Lq, Lk, Dv = 2, 8, 8, 16

    key = jax.random.PRNGKey(0)
    k_q, k_k, k_v, k_b, k_wl, k_bl, k_ww, k_bw = jax.random.split(key, 8)

    q = jax.random.normal(k_q, (B, n_head, Lq, dim_key), jnp.float32)
    kk = jax.random.normal(k_k, (B, n_head, Lk, dim_key), jnp.float32)
    v = jax.random.normal(k_v, (B, n_head, Lk, Dv), jnp.float32)
    attn_bias = jax.random.normal(k_b, (B, n_head, Lq), jnp.float32)

    # Deterministic parameter init (shapes from nn.Linear(n_head, n_head_h) etc.)
    wl = 0.2 * jax.random.normal(k_wl, (n_head_h, n_head), jnp.float32)   # fc_l.weight
    bl = 0.1 * jax.random.normal(k_bl, (n_head_h,), jnp.float32)          # fc_l.bias
    ww = 0.2 * jax.random.normal(k_ww, (n_head, n_head_h), jnp.float32)   # fc_w.weight
    bw = 0.1 * jax.random.normal(k_bw, (n_head,), jnp.float32)            # fc_w.bias

    out = add_dot_product_attention(q, kk, v, attn_bias, (wl, bl, ww, bw),
                                    dim_key, n_head, n_head_h)
    out = jax.block_until_ready(out)

    ref = reference(q, kk, v, attn_bias, wl, bl, ww, bw, dim_key)
    ref = jax.block_until_ready(ref)

    assert out.shape == (B, n_head, Lq, Dv)
    # bf16 MXU inputs + approx reciprocal => looser tolerance than pure f32.
    np.testing.assert_allclose(np.asarray(out), np.asarray(ref), rtol=2e-2, atol=2e-2)
    print("KERNEL_OK")
</pallas_src>

<mosaic_0001>
module attributes {stable_mosaic.version = 11 : i64} {
  func.func @kernel(%arg0: i32, %arg1: i32, %arg2: memref<1x8x64xbf16, #tpu.memory_space<vmem>>, %arg3: memref<8x64xf32, #tpu.memory_space<vmem>>, %arg4: memref<1x64x8xbf16, #tpu.memory_space<vmem>>, %arg5: memref<1x8x128xbf16, #tpu.memory_space<vmem>>, %arg6: memref<8x128xf32, #tpu.memory_space<vmem>>, %arg7: memref<1x1x128xf32, #tpu.memory_space<vmem>>, %arg8: memref<1x8x128xf32, #tpu.memory_space<vmem>>, %arg9: memref<32x64xbf16, #tpu.memory_space<vmem>>) attributes {dimension_semantics = [#tpu.dimension_semantics<parallel>, #tpu.dimension_semantics<parallel>], iteration_bounds = array<i64: 2, 1>, scalar_prefetch = 0 : i64, scratch_operands = 1 : i64, tpu.core_type = #tpu.core_type<tc>, window_params = [{transform_indices = @transform_0, window_bounds = array<i64: 1, 8, 64>}, {pipeline_mode = #tpu.pipeline_mode<synchronous>, transform_indices = @transform_1, window_bounds = array<i64: 8, 64>}, {transform_indices = @transform_2, window_bounds = array<i64: 1, 64, 8>}, {transform_indices = @transform_3, window_bounds = array<i64: 1, 8, 128>}, {pipeline_mode = #tpu.pipeline_mode<synchronous>, transform_indices = @transform_4, window_bounds = array<i64: 8, 128>}, {transform_indices = @transform_5, window_bounds = array<i64: 1, 1, 128>}, {transform_indices = @transform_6, window_bounds = array<i64: 1, 8, 128>}]} {
    %c0 = arith.constant 0 : index
    %c0_0 = arith.constant 0 : index
    %c0_1 = arith.constant 0 : index
    %0 = vector.load %arg4[%c0, %c0_0, %c0_1] : memref<1x64x8xbf16, #tpu.memory_space<vmem>>, vector<1x64x8xbf16>
    %1 = vector.shape_cast %0 : vector<1x64x8xbf16> to vector<64x8xbf16>
    %c0_2 = arith.constant 0 : index
    %c0_3 = arith.constant 0 : index
    %c0_4 = arith.constant 0 : index
    %2 = vector.load %arg5[%c0_2, %c0_3, %c0_4] : memref<1x8x128xbf16, #tpu.memory_space<vmem>>, vector<1x8x128xbf16>
    %3 = vector.shape_cast %2 : vector<1x8x128xbf16> to vector<8x128xbf16>
    %c0_5 = arith.constant 0 : index
    %c0_6 = arith.constant 0 : index
    %c0_7 = arith.constant 0 : index
    %4 = vector.load %arg2[%c0_5, %c0_6, %c0_7] : memref<1x8x64xbf16, #tpu.memory_space<vmem>>, vector<1x8x64xbf16>
    %5 = vector.shape_cast %4 : vector<1x8x64xbf16> to vector<8x64xbf16>
    %cst = arith.constant 0.000000e+00 : f32
    %6 = vector.broadcast %cst : f32 to vector<8x128xf32>
    %c0_8 = arith.constant 0 : index
    %c0_9 = arith.constant 0 : index
    %7 = vector.load %arg3[%c0_8, %c0_9] : memref<8x64xf32, #tpu.memory_space<vmem>>, vector<1x64xf32>
    %8 = arith.extf %5 : vector<8x64xbf16> to vector<8x64xf32>
    %9 = vector.broadcast %7 : vector<1x64xf32> to vector<8x64xf32>
    %10 = arith.mulf %8, %9 : vector<8x64xf32>
    %11 = arith.truncf %10 : vector<8x64xf32> to vector<8x64xbf16>
    %c0_10 = arith.constant 0 : index
    %c0_11 = arith.constant 0 : index
    %12 = vector.load %arg9[%c0_10, %c0_11] : memref<32x64xbf16, #tpu.memory_space<vmem>>, vector<8x64xbf16>
    tpu.vector_store %arg9[%c0_10, %c0_11], %11 {strides = array<i32>} : memref<32x64xbf16, #tpu.memory_space<vmem>>, vector<8x64xbf16>,
    %c1 = arith.constant 1 : index
    %c0_12 = arith.constant 0 : index
    %13 = vector.load %arg3[%c1, %c0_12] : memref<8x64xf32, #tpu.memory_space<vmem>>, vector<1x64xf32>
    %14 = arith.extf %5 : vector<8x64xbf16> to vector<8x64xf32>
    %15 = vector.broadcast %13 : vector<1x64xf32> to vector<8x64xf32>
    %16 = arith.mulf %14, %15 : vector<8x64xf32>
    %17 = arith.truncf %16 : vector<8x64xf32> to vector<8x64xbf16>
    %c8 = arith.constant 8 : index
    %c0_13 = arith.constant 0 : index
    %18 = vector.load %arg9[%c8, %c0_13] : memref<32x64xbf16, #tpu.memory_space<vmem>>, vector<8x64xbf16>
    tpu.vector_store %arg9[%c8, %c0_13], %17 {strides = array<i32>} : memref<32x64xbf16, #tpu.memory_space<vmem>>, vector<8x64xbf16>,
    %c2 = arith.constant 2 : index
    %c0_14 = arith.constant 0 : index
    %19 = vector.load %arg3[%c2, %c0_14] : memref<8x64xf32, #tpu.memory_space<vmem>>, vector<1x64xf32>
    %20 = arith.extf %5 : vector<8x64xbf16> to vector<8x64xf32>
    %21 = vector.broadcast %19 : vector<1x64xf32> to vector<8x64xf32>
    %22 = arith.mulf %20, %21 : vector<8x64xf32>
    %23 = arith.truncf %22 : vector<8x64xf32> to vector<8x64xbf16>
    %c16 = arith.constant 16 : index
    %c0_15 = arith.constant 0 : index
    %24 = vector.load %arg9[%c16, %c0_15] : memref<32x64xbf16, #tpu.memory_space<vmem>>, vector<8x64xbf16>
    tpu.vector_store %arg9[%c16, %c0_15], %23 {strides = array<i32>} : memref<32x64xbf16, #tpu.memory_space<vmem>>, vector<8x64xbf16>,
    %c3 = arith.constant 3 : index
    %c0_16 = arith.constant 0 : index
    %25 = vector.load %arg3[%c3, %c0_16] : memref<8x64xf32, #tpu.memory_space<vmem>>, vector<1x64xf32>
    %26 = arith.extf %5 : vector<8x64xbf16> to vector<8x64xf32>
    %27 = vector.broadcast %25 : vector<1x64xf32> to vector<8x64xf32>
    %28 = arith.mulf %26, %27 : vector<8x64xf32>
    %29 = arith.truncf %28 : vector<8x64xf32> to vector<8x64xbf16>
    %c24 = arith.constant 24 : index
    %c0_17 = arith.constant 0 : index
    %30 = vector.load %arg9[%c24, %c0_17] : memref<32x64xbf16, #tpu.memory_space<vmem>>, vector<8x64xbf16>
    tpu.vector_store %arg9[%c24, %c0_17], %29 {strides = array<i32>} : memref<32x64xbf16, #tpu.memory_space<vmem>>, vector<8x64xbf16>,
    %c0_18 = arith.constant 0 : index
    %c0_19 = arith.constant 0 : index
    %31 = vector.load %arg9[%c0_18, %c0_19] : memref<32x64xbf16, #tpu.memory_space<vmem>>, vector<32x64xbf16>
    %cst_20 = arith.constant dense<0.000000e+00> : vector<32x8xf32>
    %32 = tpu.matmul %31, %1, %cst_20 {dimension_numbers = #tpu.dot_dimension_numbers<[1], [0], [0], [1], [0, 0, 1, 1], [], []>} : vector<32x64xbf16>, vector<64x8xbf16>, vector<32x8xf32> -> vector<32x8xf32>
    %cst_21 = arith.constant dense<0xFF800000> : vector<32xf32>
    %33 = vector.multi_reduction <maximumf>, %32, %cst_21 [1] : vector<32x8xf32> to vector<32xf32>
    %34 = vector.shape_cast %33 : vector<32xf32> to vector<32x1xf32>
    %35 = vector.broadcast %34 : vector<32x1xf32> to vector<32x8xf32>
    %36 = arith.subf %32, %35 : vector<32x8xf32>
    %37 = math.exp %36 : vector<32x8xf32>
    %cst_22 = arith.constant dense<0.000000e+00> : vector<32xf32>
    %38 = vector.multi_reduction <add>, %37, %cst_22 [1] : vector<32x8xf32> to vector<32xf32>
    %39 = vector.shape_cast %38 : vector<32xf32> to vector<32x1xf32>
    %40 = arith.truncf %37 : vector<32x8xf32> to vector<32x8xbf16>
    %41 = tpu.reciprocal %39 {approx = true} : vector<32x1xf32> -> vector<32x1xf32>
    %cst_23 = arith.constant dense<0.000000e+00> : vector<32x128xf32>
    %42 = tpu.matmul %40, %3, %cst_23 {dimension_numbers = #tpu.dot_dimension_numbers<[1], [0], [0], [1], [0, 0, 1, 1], [], []>} : vector<32x8xbf16>, vector<8x128xbf16>, vector<32x128xf32> -> vector<32x128xf32>
    %43 = vector.extract_strided_slice %42 {offsets = [0, 0], sizes = [8, 128], strides = [1, 1]} : vector<32x128xf32> to vector<8x128xf32>
    %44 = vector.extract_strided_slice %41 {offsets = [0, 0], sizes = [8, 1], strides = [1, 1]} : vector<32x1xf32> to vector<8x1xf32>
    %c0_24 = arith.constant 0 : index
    %c0_25 = arith.constant 0 : index
    %45 = vector.load %arg6[%c0_24, %c0_25] : memref<8x128xf32, #tpu.memory_space<vmem>>, vector<1x128xf32>
    %46 = vector.broadcast %44 : vector<8x1xf32> to vector<8x128xf32>
    %47 = vector.broadcast %45 : vector<1x128xf32> to vector<8x128xf32>
    %48 = arith.mulf %46, %47 : vector<8x128xf32>
    %49 = arith.mulf %43, %48 : vector<8x128xf32>
    %50 = arith.addf %6, %49 : vector<8x128xf32>
    %51 = vector.extract_strided_slice %42 {offsets = [8, 0], sizes = [8, 128], strides = [1, 1]} : vector<32x128xf32> to vector<8x128xf32>
    %52 = vector.extract_strided_slice %41 {offsets = [8, 0], sizes = [8, 1], strides = [1, 1]} : vector<32x1xf32> to vector<8x1xf32>
    %c1_26 = arith.constant 1 : index
    %c0_27 = arith.constant 0 : index
    %53 = vector.load %arg6[%c1_26, %c0_27] : memref<8x128xf32, #tpu.memory_space<vmem>>, vector<1x128xf32>
    %54 = vector.broadcast %52 : vector<8x1xf32> to vector<8x128xf32>
    %55 = vector.broadcast %53 : vector<1x128xf32> to vector<8x128xf32>
    %56 = arith.mulf %54, %55 : vector<8x128xf32>
    %57 = arith.mulf %51, %56 : vector<8x128xf32>
    %58 = arith.addf %50, %57 : vector<8x128xf32>
    %59 = vector.extract_strided_slice %42 {offsets = [16, 0], sizes = [8, 128], strides = [1, 1]} : vector<32x128xf32> to vector<8x128xf32>
    %60 = vector.extract_strided_slice %41 {offsets = [16, 0], sizes = [8, 1], strides = [1, 1]} : vector<32x1xf32> to vector<8x1xf32>
    %c2_28 = arith.constant 2 : index
    %c0_29 = arith.constant 0 : index
    %61 = vector.load %arg6[%c2_28, %c0_29] : memref<8x128xf32, #tpu.memory_space<vmem>>, vector<1x128xf32>
    %62 = vector.broadcast %60 : vector<8x1xf32> to vector<8x128xf32>
    %63 = vector.broadcast %61 : vector<1x128xf32> to vector<8x128xf32>
    %64 = arith.mulf %62, %63 : vector<8x128xf32>
    %65 = arith.mulf %59, %64 : vector<8x128xf32>
    %66 = arith.addf %58, %65 : vector<8x128xf32>
    %67 = vector.extract_strided_slice %42 {offsets = [24, 0], sizes = [8, 128], strides = [1, 1]} : vector<32x128xf32> to vector<8x128xf32>
    %68 = vector.extract_strided_slice %41 {offsets = [24, 0], sizes = [8, 1], strides = [1, 1]} : vector<32x1xf32> to vector<8x1xf32>
    %c3_30 = arith.constant 3 : index
    %c0_31 = arith.constant 0 : index
    %69 = vector.load %arg6[%c3_30, %c0_31] : memref<8x128xf32, #tpu.memory_space<vmem>>, vector<1x128xf32>
    %70 = vector.broadcast %68 : vector<8x1xf32> to vector<8x128xf32>
    %71 = vector.broadcast %69 : vector<1x128xf32> to vector<8x128xf32>
    %72 = arith.mulf %70, %71 : vector<8x128xf32>
    %73 = arith.mulf %67, %72 : vector<8x128xf32>
    %74 = arith.addf %66, %73 : vector<8x128xf32>
    %c4 = arith.constant 4 : index
    %c0_32 = arith.constant 0 : index
    %75 = vector.load %arg3[%c4, %c0_32] : memref<8x64xf32, #tpu.memory_space<vmem>>, vector<1x64xf32>
    %76 = arith.extf %5 : vector<8x64xbf16> to vector<8x64xf32>
    %77 = vector.broadcast %75 : vector<1x64xf32> to vector<8x64xf32>
    %78 = arith.mulf %76, %77 : vector<8x64xf32>
    %79 = arith.truncf %78 : vector<8x64xf32> to vector<8x64xbf16>
    %c0_33 = arith.constant 0 : index
    %c0_34 = arith.constant 0 : index
    %80 = vector.load %arg9[%c0_33, %c0_34] : memref<32x64xbf16, #tpu.memory_space<vmem>>, vector<8x64xbf16>
    tpu.vector_store %arg9[%c0_33, %c0_34], %79 {strides = array<i32>} : memref<32x64xbf16, #tpu.memory_space<vmem>>, vector<8x64xbf16>,
    %c5 = arith.constant 5 : index
    %c0_35 = arith.constant 0 : index
    %81 = vector.load %arg3[%c5, %c0_35] : memref<8x64xf32, #tpu.memory_space<vmem>>, vector<1x64xf32>
    %82 = arith.extf %5 : vector<8x64xbf16> to vector<8x64xf32>
    %83 = vector.broadcast %81 : vector<1x64xf32> to vector<8x64xf32>
    %84 = arith.mulf %82, %83 : vector<8x64xf32>
    %85 = arith.truncf %84 : vector<8x64xf32> to vector<8x64xbf16>
    %c8_36 = arith.constant 8 : index
    %c0_37 = arith.constant 0 : index
    %86 = vector.load %arg9[%c8_36, %c0_37] : memref<32x64xbf16, #tpu.memory_space<vmem>>, vector<8x64xbf16>
    tpu.vector_store %arg9[%c8_36, %c0_37], %85 {strides = array<i32>} : memref<32x64xbf16, #tpu.memory_space<vmem>>, vector<8x64xbf16>,
    %c6 = arith.constant 6 : index
    %c0_38 = arith.constant 0 : index
    %87 = vector.load %arg3[%c6, %c0_38] : memref<8x64xf32, #tpu.memory_space<vmem>>, vector<1x64xf32>
    %88 = arith.extf %5 : vector<8x64xbf16> to vector<8x64xf32>
    %89 = vector.broadcast %87 : vector<1x64xf32> to vector<8x64xf32>
    %90 = arith.mulf %88, %89 : vector<8x64xf32>
    %91 = arith.truncf %90 : vector<8x64xf32> to vector<8x64xbf16>
    %c16_39 = arith.constant 16 : index
    %c0_40 = arith.constant 0 : index
    %92 = vector.load %arg9[%c16_39, %c0_40] : memref<32x64xbf16, #tpu.memory_space<vmem>>, vector<8x64xbf16>
    tpu.vector_store %arg9[%c16_39, %c0_40], %91 {strides = array<i32>} : memref<32x64xbf16, #tpu.memory_space<vmem>>, vector<8x64xbf16>,
    %c7 = arith.constant 7 : index
    %c0_41 = arith.constant 0 : index
    %93 = vector.load %arg3[%c7, %c0_41] : memref<8x64xf32, #tpu.memory_space<vmem>>, vector<1x64xf32>
    %94 = arith.extf %5 : vector<8x64xbf16> to vector<8x64xf32>
    %95 = vector.broadcast %93 : vector<1x64xf32> to vector<8x64xf32>
    %96 = arith.mulf %94, %95 : vector<8x64xf32>
    %97 = arith.truncf %96 : vector<8x64xf32> to vector<8x64xbf16>
    %c24_42 = arith.constant 24 : index
    %c0_43 = arith.constant 0 : index
    %98 = vector.load %arg9[%c24_42, %c0_43] : memref<32x64xbf16, #tpu.memory_space<vmem>>, vector<8x64xbf16>
    tpu.vector_store %arg9[%c24_42, %c0_43], %97 {strides = array<i32>} : memref<32x64xbf16, #tpu.memory_space<vmem>>, vector<8x64xbf16>,
    %c0_44 = arith.constant 0 : index
    %c0_45 = arith.constant 0 : index
    %99 = vector.load %arg9[%c0_44, %c0_45] : memref<32x64xbf16, #tpu.memory_space<vmem>>, vector<32x64xbf16>
    %cst_46 = arith.constant dense<0.000000e+00> : vector<32x8xf32>
    %100 = tpu.matmul %99, %1, %cst_46 {dimension_numbers = #tpu.dot_dimension_numbers<[1], [0], [0], [1], [0, 0, 1, 1], [], []>} : vector<32x64xbf16>, vector<64x8xbf16>, vector<32x8xf32> -> vector<32x8xf32>
    %cst_47 = arith.constant dense<0xFF800000> : vector<32xf32>
    %101 = vector.multi_reduction <maximumf>, %100, %cst_47 [1] : vector<32x8xf32> to vector<32xf32>
    %102 = vector.shape_cast %101 : vector<32xf32> to vector<32x1xf32>
    %103 = vector.broadcast %102 : vector<32x1xf32> to vector<32x8xf32>
    %104 = arith.subf %100, %103 : vector<32x8xf32>
    %105 = math.exp %104 : vector<32x8xf32>
    %cst_48 = arith.constant dense<0.000000e+00> : vector<32xf32>
    %106 = vector.multi_reduction <add>, %105, %cst_48 [1] : vector<32x8xf32> to vector<32xf32>
    %107 = vector.shape_cast %106 : vector<32xf32> to vector<32x1xf32>
    %108 = arith.truncf %105 : vector<32x8xf32> to vector<32x8xbf16>
    %109 = tpu.reciprocal %107 {approx = true} : vector<32x1xf32> -> vector<32x1xf32>
    %cst_49 = arith.constant dense<0.000000e+00> : vector<32x128xf32>
    %110 = tpu.matmul %108, %3, %cst_49 {dimension_numbers = #tpu.dot_dimension_numbers<[1], [0], [0], [1], [0, 0, 1, 1], [], []>} : vector<32x8xbf16>, vector<8x128xbf16>, vector<32x128xf32> -> vector<32x128xf32>
    %111 = vector.extract_strided_slice %110 {offsets = [0, 0], sizes = [8, 128], strides = [1, 1]} : vector<32x128xf32> to vector<8x128xf32>
    %112 = vector.extract_strided_slice %109 {offsets = [0, 0], sizes = [8, 1], strides = [1, 1]} : vector<32x1xf32> to vector<8x1xf32>
    %c4_50 = arith.constant 4 : index
    %c0_51 = arith.constant 0 : index
    %113 = vector.load %arg6[%c4_50, %c0_51] : memref<8x128xf32, #tpu.memory_space<vmem>>, vector<1x128xf32>
    %114 = vector.broadcast %112 : vector<8x1xf32> to vector<8x128xf32>
    %115 = vector.broadcast %113 : vector<1x128xf32> to vector<8x128xf32>
    %116 = arith.mulf %114, %115 : vector<8x128xf32>
    %117 = arith.mulf %111, %116 : vector<8x128xf32>
    %118 = arith.addf %74, %117 : vector<8x128xf32>
    %119 = vector.extract_strided_slice %110 {offsets = [8, 0], sizes = [8, 128], strides = [1, 1]} : vector<32x128xf32> to vector<8x128xf32>
    %120 = vector.extract_strided_slice %109 {offsets = [8, 0], sizes = [8, 1], strides = [1, 1]} : vector<32x1xf32> to vector<8x1xf32>
    %c5_52 = arith.constant 5 : index
    %c0_53 = arith.constant 0 : index
    %121 = vector.load %arg6[%c5_52, %c0_53] : memref<8x128xf32, #tpu.memory_space<vmem>>, vector<1x128xf32>
    %122 = vector.broadcast %120 : vector<8x1xf32> to vector<8x128xf32>
    %123 = vector.broadcast %121 : vector<1x128xf32> to vector<8x128xf32>
    %124 = arith.mulf %122, %123 : vector<8x128xf32>
    %125 = arith.mulf %119, %124 : vector<8x128xf32>
    %126 = arith.addf %118, %125 : vector<8x128xf32>
    %127 = vector.extract_strided_slice %110 {offsets = [16, 0], sizes = [8, 128], strides = [1, 1]} : vector<32x128xf32> to vector<8x128xf32>
    %128 = vector.extract_strided_slice %109 {offsets = [16, 0], sizes = [8, 1], strides = [1, 1]} : vector<32x1xf32> to vector<8x1xf32>
    %c6_54 = arith.constant 6 : index
    %c0_55 = arith.constant 0 : index
    %129 = vector.load %arg6[%c6_54, %c0_55] : memref<8x128xf32, #tpu.memory_space<vmem>>, vector<1x128xf32>
    %130 = vector.broadcast %128 : vector<8x1xf32> to vector<8x128xf32>
    %131 = vector.broadcast %129 : vector<1x128xf32> to vector<8x128xf32>
    %132 = arith.mulf %130, %131 : vector<8x128xf32>
    %133 = arith.mulf %127, %132 : vector<8x128xf32>
    %134 = arith.addf %126, %133 : vector<8x128xf32>
    %135 = vector.extract_strided_slice %110 {offsets = [24, 0], sizes = [8, 128], strides = [1, 1]} : vector<32x128xf32> to vector<8x128xf32>
    %136 = vector.extract_strided_slice %109 {offsets = [24, 0], sizes = [8, 1], strides = [1, 1]} : vector<32x1xf32> to vector<8x1xf32>
    %c7_56 = arith.constant 7 : index
    %c0_57 = arith.constant 0 : index
    %137 = vector.load %arg6[%c7_56, %c0_57] : memref<8x128xf32, #tpu.memory_space<vmem>>, vector<1x128xf32>
    %138 = vector.broadcast %136 : vector<8x1xf32> to vector<8x128xf32>
    %139 = vector.broadcast %137 : vector<1x128xf32> to vector<8x128xf32>
    %140 = arith.mulf %138, %139 : vector<8x128xf32>
    %141 = arith.mulf %135, %140 : vector<8x128xf32>
    %142 = arith.addf %134, %141 : vector<8x128xf32>
    %c0_58 = arith.constant 0 : index
    %c0_59 = arith.constant 0 : index
    %c0_60 = arith.constant 0 : index
    %143 = vector.load %arg7[%c0_58, %c0_59, %c0_60] : memref<1x1x128xf32, #tpu.memory_space<vmem>>, vector<1x1x128xf32>
    %144 = vector.shape_cast %143 : vector<1x1x128xf32> to vector<1x128xf32>
    %145 = vector.broadcast %144 : vector<1x128xf32> to vector<8x128xf32>
    %146 = arith.addf %142, %145 : vector<8x128xf32>
    %c0_61 = arith.constant 0 : index
    %c0_62 = arith.constant 0 : index
    %c0_63 = arith.constant 0 : index
    %147 = vector.load %arg8[%c0_61, %c0_62, %c0_63] : memref<1x8x128xf32, #tpu.memory_space<vmem>>, vector<1x8x128xf32>
    %148 = vector.shape_cast %147 : vector<1x8x128xf32> to vector<8x128xf32>
    %149 = vector.shape_cast %146 : vector<8x128xf32> to vector<1x8x128xf32>
    tpu.vector_store %arg8[%c0_61, %c0_62, %c0_63], %149 {strides = array<i32>} : memref<1x8x128xf32, #tpu.memory_space<vmem>>, vector<1x8x128xf32>,
    return
  }
  func.func @transform_0(%arg0: i32, %arg1: i32) -> (i32, i32, i32) {
    %c0_i32 = arith.constant 0 : i32
    %c0_i32_0 = arith.constant 0 : i32
    return %arg0, %arg1, %c0_i32 : i32, i32, i32
  }
  func.func @transform_1(%arg0: i32, %arg1: i32) -> (i32, i32) {
    %c0_i32 = arith.constant 0 : i32
    %c0_i32_0 = arith.constant 0 : i32
    %c0_i32_1 = arith.constant 0 : i32
    return %c0_i32, %c0_i32_0 : i32, i32
  }
  func.func @transform_2(%arg0: i32, %arg1: i32) -> (i32, i32, i32) {
    %c0_i32 = arith.constant 0 : i32
    %c0_i32_0 = arith.constant 0 : i32
    %c0_i32_1 = arith.constant 0 : i32
    return %arg0, %c0_i32, %c0_i32_0 : i32, i32, i32
  }
  func.func @transform_3(%arg0: i32, %arg1: i32) -> (i32, i32, i32) {
    %c0_i32 = arith.constant 0 : i32
    %c0_i32_0 = arith.constant 0 : i32
    %c0_i32_1 = arith.constant 0 : i32
    return %arg0, %c0_i32, %c0_i32_0 : i32, i32, i32
  }
  func.func @transform_4(%arg0: i32, %arg1: i32) -> (i32, i32) {
    %c0_i32 = arith.constant 0 : i32
    %c0_i32_0 = arith.constant 0 : i32
    %c0_i32_1 = arith.constant 0 : i32
    return %c0_i32, %c0_i32_0 : i32, i32
  }
  func.func @transform_5(%arg0: i32, %arg1: i32) -> (i32, i32, i32) {
    %c0_i32 = arith.constant 0 : i32
    %c0_i32_0 = arith.constant 0 : i32
    %c0_i32_1 = arith.constant 0 : i32
    return %arg0, %c0_i32, %c0_i32_0 : i32, i32, i32
  }
  func.func @transform_6(%arg0: i32, %arg1: i32) -> (i32, i32, i32) {
    %c0_i32 = arith.constant 0 : i32
    %c0_i32_0 = arith.constant 0 : i32
    return %arg0, %arg1, %c0_i32 : i32, i32, i32
  }
}

</mosaic_0001>

<llo_original>
// kernel: tpu_custom_call.1
$region0: #{tpu_custom_call.1}
  #allocation0 [shape = 'u32[]', space=smem, size = 0x4, offset = 0x4, fixed_abs, tag = 'smem constant byte address 0x4 - core index']
  #allocation1 [shape = 'u32[144,128]{1,0:T(1,128)}', space=vmem, size = 0x12000, scoped, tag = 'internal scratch']
  #allocation2 [shape = 'bf16[32,64]{1,0:T(16,128)(2,1)}', space=vmem, size = 0x2000, scoped, tag = 'scratch operand']
  %s0 = inlined_call_operand.vmem [shape: bf16[2,8,64], index: 0, kind: input, shape index: {}]
  %s1 = inlined_call_operand.vmem [shape: f32[8,64], index: 1, kind: input, shape index: {}]
  %s2 = inlined_call_operand.vmem [shape: bf16[2,64,8], index: 2, kind: input, shape index: {}]
  %s3 = inlined_call_operand.vmem [shape: bf16[2,8,128], index: 3, kind: input, shape index: {}]
  %s4 = inlined_call_operand.vmem [shape: f32[8,128], index: 4, kind: input, shape index: {}]
  %s5 = inlined_call_operand.vmem [shape: f32[2,1,128], index: 5, kind: input, shape index: {}]
  %s6 = inlined_call_operand.hbm [shape: f32[2,8,128], index: 6, kind: output, shape index: {}]
  %s7 = sld [smem:[#allocation0]]
  $region57: #{tpu_custom_call.1} parent=0
    _
  %s9 = ssub.s32 1, %s7
  %s10 = scalar_select 0, %s9, %s7
  $region1: #{tpu_custom_call.1} parent=0
    #allocation3 [shape = 'u8[8192]{0}', space=vmem, size = 0x2000, scoped, tag = 'output window, operand 0']
    #allocation4 [shape = 's32[2]{0}', space=sflag, size = 0x8, scoped, tag = 'scoped memory for tpu_custom_call.1']
    %11 = vsyncpa [#allocation4], 0
    %s12 = scalar_lea.sflag [#allocation4], 1
    %13 = vsyncpa %s12, 0
    loop: start=0, step=1, limit=4
    $region2: #{tpu_custom_call.1} parent=1 // loop_pre_header
      _
    $region3: #{tpu_custom_call.1} parent=1 // loop_header
      %s15 = sphi 0, %s19
      %p16 = scmp.ge.s32.totalorder %s15, 4
      %s22 = sphi 0, %s34
      %s23 = sphi 0, %s30
      %s24 = sphi 0, %s22
      %s25 = sphi 0, %s23
      %s26 = sphi 0, %s24
      %s27 = sphi 0, %s25
      %s39 = sphi 0, %s41
      %s42 = sphi 0, %s39
      %s43 = sphi 0, %s42
      %s59 = sphi 0, %s43
      %s63 = sphi 0, %s63
      %s65 = sphi 0, %s63
      %s66 = sphi 0, %s65
      %s80 = sphi 0, %s66
      %s86 = sphi 0, %s88
      %s89 = sphi 0, %s86
      %s90 = sphi 0, %s89
      %s106 = sphi 0, %s90
      %s112 = sphi 0, %s114
      %s115 = sphi 0, %s112
      %s116 = sphi 0, %s115
      %s132 = sphi 0, %s116
      %s136 = sphi 0, %s136
      %s138 = sphi 0, %s136
      %s139 = sphi 0, %s138
      %s153 = sphi 0, %s139
      %s159 = sphi 0, %s161
      %s162 = sphi 0, %s159
      %s163 = sphi 0, %s162
      %s179 = sphi 0, %s163
      %s187 = sphi 0, %s189
      %s190 = sphi 0, %s187
      %s191 = sphi 0, %s190
      %s207 = sphi 0, %s191
    $region4: #{tpu_custom_call.1} parent=1 // loop_header_branch
      %18 = sbr.rel (%p16) target = $region8
    $region5: #{tpu_custom_call.1} parent=1 // loop_body
      %s20 = ssub.s32 %s15, 1
      %s21 = ssub.s32 %s15, 2
      %s28 = sadd.s32 1, %s23
      %p29 = scmp.ge.s32.totalorder %s28, 1
      %s30 = scalar_select %p29, 0, %s28
      %s31 = sadd.s32 1, %s22
      %s32 = scalar_select %p29, %s31, %s22
      %p33 = scmp.ge.s32.totalorder %s32, 2
      %s34 = scalar_select %p33, 0, %s32
      %s35 = ssub.s32 %s22, %s34
      %s36 = ssub.s32 %s23, %s30
      %s37 = sor.u32 %s35, %s36
      %p38 = scmp.eq.s32.totalorder %s37, 0
      %s40 = sadd.s32 %s39, 1
      %s41 = scalar_select %p38, %s39, %s40
      %p44 = pneg %p38
      %p45 = scmp.eq.s32.totalorder %s15, 1
      %p46 = por %p44, %p45
      %p47 = scmp.ne.s32.totalorder %s39, %s42
      %p48 = scmp.eq.s32.totalorder %s15, 0
      %p49 = por %p47, %p48
      %p50 = scmp.ne.s32.totalorder %s39, %s42
      %p51 = scmp.eq.s32.totalorder %s20, 1
      %p52 = por %p50, %p51
      %p53 = scmp.ne.s32.totalorder %s42, %s43
      %p54 = scmp.eq.s32.totalorder %s20, 0
      %p55 = por %p53, %p54
      %p56 = scmp.ne.s32.totalorder %s42, %s43
      %p57 = scmp.eq.s32.totalorder %s21, 1
      %p58 = por %p56, %p57
      %p60 = scmp.ne.s32.totalorder %s43, %s59
      %p61 = scmp.eq.s32.totalorder %s21, 0
      %p62 = por %p60, %p61
      %s64 = sadd.s32 %s63, 1
      %p67 = scmp.eq.s32.totalorder %s15, 1
      %p68 = scmp.ne.s32.totalorder %s63, %s65
      %p69 = scmp.eq.s32.totalorder %s15, 0
      %p70 = por %p68, %p69
      %p71 = scmp.ne.s32.totalorder %s63, %s65
      %p72 = scmp.eq.s32.totalorder %s20, 1
      %p73 = por %p71, %p72
      %p74 = scmp.ne.s32.totalorder %s65, %s66
      %p75 = scmp.eq.s32.totalorder %s20, 0
      %p76 = por %p74, %p75
      %p77 = scmp.ne.s32.totalorder %s65, %s66
      %p78 = scmp.eq.s32.totalorder %s21, 1
      %p79 = por %p77, %p78
      %p81 = scmp.ne.s32.totalorder %s66, %s80
      %p82 = scmp.eq.s32.totalorder %s21, 0
      %p83 = por %p81, %p82
      %s84 = ssub.s32 %s22, %s34
      %p85 = scmp.eq.s32.totalorder %s84, 0
      %s87 = sadd.s32 %s86, 1
      %s88 = scalar_select %p85, %s86, %s87
      %p91 = pneg %p85
      %p92 = scmp.eq.s32.totalorder %s15, 1
      %p93 = por %p91, %p92
      %p94 = scmp.ne.s32.totalorder %s86, %s89
      %p95 = scmp.eq.s32.totalorder %s15, 0
      %p96 = por %p94, %p95
      %p97 = scmp.ne.s32.totalorder %s86, %s89
      %p98 = scmp.eq.s32.totalorder %s20, 1
      %p99 = por %p97, %p98
      %p100 = scmp.ne.s32.totalorder %s89, %s90
      %p101 = scmp.eq.s32.totalorder %s20, 0
      %p102 = por %p100, %p101
      %p103 = scmp.ne.s32.totalorder %s89, %s90
      %p104 = scmp.eq.s32.totalorder %s21, 1
      %p105 = por %p103, %p104
      %p107 = scmp.ne.s32.totalorder %s90, %s106
      %p108 = scmp.eq.s32.totalorder %s21, 0
      %p109 = por %p107, %p108
      %s110 = ssub.s32 %s22, %s34
      %p111 = scmp.eq.s32.totalorder %s110, 0
      %s113 = sadd.s32 %s112, 1
      %s114 = scalar_select %p111, %s112, %s113
      %p117 = pneg %p111
      %p118 = scmp.eq.s32.totalorder %s15, 1
      %p119 = por %p117, %p118
      %p120 = scmp.ne.s32.totalorder %s112, %s115
      %p121 = scmp.eq.s32.totalorder %s15, 0
      %p122 = por %p120, %p121
      %p123 = scmp.ne.s32.totalorder %s112, %s115
      %p124 = scmp.eq.s32.totalorder %s20, 1
      %p125 = por %p123, %p124
      %p126 = scmp.ne.s32.totalorder %s115, %s116
      %p127 = scmp.eq.s32.totalorder %s20, 0
      %p128 = por %p126, %p127
      %p129 = scmp.ne.s32.totalorder %s115, %s116
      %p130 = scmp.eq.s32.totalorder %s21, 1
      %p131 = por %p129, %p130
      %p133 = scmp.ne.s32.totalorder %s116, %s132
      %p134 = scmp.eq.s32.totalorder %s21, 0
      %p135 = por %p133, %p134
      %s137 = sadd.s32 %s136, 1
      %p140 = scmp.eq.s32.totalorder %s15, 1
      %p141 = scmp.ne.s32.totalorder %s136, %s138
      %p142 = scmp.eq.s32.totalorder %s15, 0
      %p143 = por %p141, %p142
      %p144 = scmp.ne.s32.totalorder %s136, %s138
      %p145 = scmp.eq.s32.totalorder %s20, 1
      %p146 = por %p144, %p145
      %p147 = scmp.ne.s32.totalorder %s138, %s139
      %p148 = scmp.eq.s32.totalorder %s20, 0
      %p149 = por %p147, %p148
      %p150 = scmp.ne.s32.totalorder %s138, %s139
      %p151 = scmp.eq.s32.totalorder %s21, 1
      %p152 = por %p150, %p151
      %p154 = scmp.ne.s32.totalorder %s139, %s153
      %p155 = scmp.eq.s32.totalorder %s21, 0
      %p156 = por %p154, %p155
      %s157 = ssub.s32 %s22, %s34
      %p158 = scmp.eq.s32.totalorder %s157, 0
      %s160 = sadd.s32 %s159, 1
      %s161 = scalar_select %p158, %s159, %s160
      %p164 = pneg %p158
      %p165 = scmp.eq.s32.totalorder %s15, 1
      %p166 = por %p164, %p165
      %p167 = scmp.ne.s32.totalorder %s159, %s162
      %p168 = scmp.eq.s32.totalorder %s15, 0
      %p169 = por %p167, %p168
      %p170 = scmp.ne.s32.totalorder %s159, %s162
      %p171 = scmp.eq.s32.totalorder %s20, 1
      %p172 = por %p170, %p171
      %p173 = scmp.ne.s32.totalorder %s162, %s163
      %p174 = scmp.eq.s32.totalorder %s20, 0
      %p175 = por %p173, %p174
      %p176 = scmp.ne.s32.totalorder %s162, %s163
      %p177 = scmp.eq.s32.totalorder %s21, 1
      %p178 = por %p176, %p177
      %p180 = scmp.ne.s32.totalorder %s163, %s179
      %p181 = scmp.eq.s32.totalorder %s21, 0
      %p182 = por %p180, %p181
      %s183 = ssub.s32 %s22, %s34
      %s184 = ssub.s32 %s23, %s30
      %s185 = sor.u32 %s183, %s184
      %p186 = scmp.eq.s32.totalorder %s185, 0
      %s188 = sadd.s32 %s187, 1
      %s189 = scalar_select %p186, %s187, %s188
      %p192 = pneg %p186
      %p193 = scmp.eq.s32.totalorder %s15, 1
      %p194 = por %p192, %p193
      %p195 = scmp.ne.s32.totalorder %s187, %s190
      %p196 = scmp.eq.s32.totalorder %s15, 0
      %p197 = por %p195, %p196
      %p198 = scmp.ne.s32.totalorder %s187, %s190
      %p199 = scmp.eq.s32.totalorder %s20, 1
      %p200 = por %p198, %p199
      %p201 = scmp.ne.s32.totalorder %s190, %s191
      %p202 = scmp.eq.s32.totalorder %s20, 0
      %p203 = por %p201, %p202
      %p204 = scmp.ne.s32.totalorder %s190, %s191
      %p205 = scmp.eq.s32.totalorder %s21, 1
      %p206 = por %p204, %p205
      %p208 = scmp.ne.s32.totalorder %s191, %s207
      %p209 = scmp.eq.s32.totalorder %s21, 0
      %p210 = por %p208, %p209
      %p211 = scmp.le.s32.totalorder 1, %s15
      %p212 = scmp.lt.s32.totalorder %s15, 3
      %p213 = pnand %p211, %p212
      %p214 = pneg %p213
      // Predicated region
      $region9: #{tpu_custom_call.1} parent=5 // pred_check
        _
      $region10: #{tpu_custom_call.1} parent=5 // pred_check_branch
        %216 = sbr.rel (%p213) target = $region12
      $region11: #{tpu_custom_call.1} parent=5 // pred_region
        %s217 = ssub.s32 %s15, 1
        // Predicated region
        $region13: #{tpu_custom_call.1} parent=11 // pred_check
          %p218 = pneg %p76
        $region14: #{tpu_custom_call.1} parent=11 // pred_check_branch
          %220 = sbr.rel (%p218) target = $region16
        $region15: #{tpu_custom_call.1} parent=11 // pred_region
          _
        $region16: #{tpu_custom_call.1} parent=11 // pred_fallthru
          _
        // Predicated region
        $region17: #{tpu_custom_call.1} parent=11 // pred_check
          %p221 = pneg %p149
        $region18: #{tpu_custom_call.1} parent=11 // pred_check_branch
          %223 = sbr.rel (%p221) target = $region20
        $region19: #{tpu_custom_call.1} parent=11 // pred_region
          _
        $region20: #{tpu_custom_call.1} parent=11 // pred_fallthru
          _
      $region12: #{tpu_custom_call.1} parent=5 // pred_fallthru
        _
      %p224 = scmp.lt.s32.totalorder %s15, 2
      // Predicated region
      $region21: #{tpu_custom_call.1} parent=5 // pred_check
        %p225 = pneg %p224
      $region22: #{tpu_custom_call.1} parent=5 // pred_check_branch
        %227 = sbr.rel (%p225) target = $region24
      $region23: #{tpu_custom_call.1} parent=5 // pred_region
        // Predicated region
        $region25: #{tpu_custom_call.1} parent=23 // pred_check
          %p228 = pneg %p49
        $region26: #{tpu_custom_call.1} parent=23 // pred_check_branch
          %230 = sbr.rel (%p228) target = $region28
        $region27: #{tpu_custom_call.1} parent=23 // pred_region
          %p231 = scmp.lt.s32.totalorder %s22, 1
          %s232 = scalar_select %p231, %s22, 1
          %p233 = scmp.lt.s32.totalorder %s23, 0
          %s234 = scalar_select %p233, %s23, 0
          %s235 = sadd.s32 %s234, %s232
          %s236 = smul.addr %s235, 4
          %s237 = scalar_lea.vmem %s0, %s236
        $region28: #{tpu_custom_call.1} parent=23 // pred_fallthru
          _
        // Predicated region
        $region29: #{tpu_custom_call.1} parent=23 // pred_check
          %p238 = pneg %p96
        $region30: #{tpu_custom_call.1} parent=23 // pred_check_branch
          %240 = sbr.rel (%p238) target = $region32
        $region31: #{tpu_custom_call.1} parent=23 // pred_region
          %p241 = scmp.lt.s32.totalorder %s22, 1
          %s242 = scalar_select %p241, %s22, 1
          %s243 = smul.addr %s242, 8
          %s244 = smul.addr %s243, 4
          %s245 = scalar_lea.vmem %s2, %s244
        $region32: #{tpu_custom_call.1} parent=23 // pred_fallthru
          _
        // Predicated region
        $region33: #{tpu_custom_call.1} parent=23 // pred_check
          %p246 = pneg %p122
        $region34: #{tpu_custom_call.1} parent=23 // pred_check_branch
          %248 = sbr.rel (%p246) target = $region36
        $region35: #{tpu_custom_call.1} parent=23 // pred_region
          %p249 = scmp.lt.s32.totalorder %s22, 1
          %s250 = scalar_select %p249, %s22, 1
          %s251 = smul.addr %s250, 4
          %s252 = scalar_lea.vmem %s3, %s251
        $region36: #{tpu_custom_call.1} parent=23 // pred_fallthru
          _
        // Predicated region
        $region37: #{tpu_custom_call.1} parent=23 // pred_check
          %p253 = pneg %p169
        $region38: #{tpu_custom_call.1} parent=23 // pred_check_branch
          %255 = sbr.rel (%p253) target = $region40
        $region39: #{tpu_custom_call.1} parent=23 // pred_region
          %p256 = scmp.lt.s32.totalorder %s22, 1
          %s257 = scalar_select %p256, %s22, 1
          %s258 = scalar_lea.vmem %s5, %s257
        $region40: #{tpu_custom_call.1} parent=23 // pred_fallthru
          _
      $region24: #{tpu_custom_call.1} parent=5 // pred_fallthru
        _
      %p259 = scmp.le.s32.totalorder 1, %s15
      %p260 = scmp.lt.s32.totalorder %s15, 3
      %p261 = pnand %p259, %p260
      %p262 = pneg %p261
      // Predicated region
      $region41: #{tpu_custom_call.1} parent=5 // pred_check
        _
      $region42: #{tpu_custom_call.1} parent=5 // pred_check_branch
        %264 = sbr.rel (%p261) target = $region44
      $region43: #{tpu_custom_call.1} parent=5 // pred_region
        %s265 = ssub.s32 %s15, 1
        %p266 = scmp.lt.s32.totalorder %s24, 1
        %s267 = scalar_select %p266, %s24, 1
        %p268 = scmp.lt.s32.totalorder %s25, 0
        %s269 = scalar_select %p268, %s25, 0
        %s270 = sadd.s32 %s269, %s267
        %s271 = smul.addr %s270, 4
        %s272 = scalar_lea.vmem %s0, %s271
        %p273 = pneg %p55
        %p274 = pneg %p52
        %p275 = pneg %p76
        %p276 = pneg %p73
        %p277 = scmp.lt.s32.totalorder %s24, 1
        %s278 = scalar_select %p277, %s24, 1
        %s279 = smul.addr %s278, 8
        %s280 = smul.addr %s279, 4
        %s281 = scalar_lea.vmem %s2, %s280
        %p282 = pneg %p102
        %p283 = pneg %p99
        %p284 = scmp.lt.s32.totalorder %s24, 1
        %s285 = scalar_select %p284, %s24, 1
        %s286 = smul.addr %s285, 4
        %s287 = scalar_lea.vmem %s3, %s286
        %p288 = pneg %p128
        %p289 = pneg %p125
        %p290 = pneg %p149
        %p291 = pneg %p146
        %p292 = scmp.lt.s32.totalorder %s24, 1
        %s293 = scalar_select %p292, %s24, 1
        %s294 = scalar_lea.vmem %s5, %s293
        %p295 = pneg %p175
        %p296 = pneg %p172
        %p297 = pneg %p203
        %p298 = pneg %p200
        %s299 = sand.u32 %s190, 1
        %s300 = scalar_lea.sflag [#allocation4], %s299
        %s301 = sand.u32 %s190, 1
        %s302 = smul.addr %s301, 8
        %s303 = scalar_lea.vmem [#allocation3], %s302
        %p304 = scmp.lt.s32.totalorder %s24, 1
        %s305 = scalar_select %p304, %s24, 1
        %p306 = scmp.lt.s32.totalorder %s25, 0
        %s307 = scalar_select %p306, %s25, 0
        %s308 = sadd.s32 %s307, %s305
        %s309 = smul.addr %s308, 4
        %s310 = scalar_lea.vmem %s0, %s309
        %p311 = scmp.lt.s32.totalorder %s24, 1
        %s312 = scalar_select %p311, %s24, 1
        %s313 = smul.addr %s312, 8
        %s314 = smul.addr %s313, 4
        %s315 = scalar_lea.vmem %s2, %s314
        %p316 = scmp.lt.s32.totalorder %s24, 1
        %s317 = scalar_select %p316, %s24, 1
        %s318 = smul.addr %s317, 4
        %s319 = scalar_lea.vmem %s3, %s318
        %p320 = scmp.lt.s32.totalorder %s24, 1
        %s321 = scalar_select %p320, %s24, 1
        %s322 = scalar_lea.vmem %s5, %s321
        %v324 = vld [vmem:[%s315] sm:$0xf]
        %v325 = vld [vmem:[%s315 + $0x4] sm:$0xf]
        %v326 = vld [vmem:[%s315 + $0x8] sm:$0xf]
        %v327 = vld [vmem:[%s315 + $0xc] sm:$0xf]
        %v328 = vld [vmem:[%s315 + $0x10] sm:$0xf]
        %v329 = vld [vmem:[%s315 + $0x14] sm:$0xf]
        %v330 = vld [vmem:[%s315 + $0x18] sm:$0xf]
        %v331 = vld [vmem:[%s315 + $0x1c] sm:$0xf]
        %v332 = vld [vmem:[%s319] sm:$0xf]
        %v333 = vld [vmem:[%s310] sm:$0xf]
        %v334 = vld [vmem:[%s1] sm:$0x1]
        %v335 = vunpack.c.l.bf16 %v333
        %v336 = vlaneseq
        %v337 = vshrl.u32 %v336, 7
        %v338 = vsub.s32 0, %v337
        %v339 = vrot.slane %v334, %v338
        %v340 = vmul.f32 %v335, %v339
        %v341 = vpack.c.bf16 %v340, %v340
        %vm342 = vcmask 519168
        %343 = vst.msk [vmem:[#allocation2] sm:$0xf] %vm342, %v341
        %v344 = vld [vmem:[%s1 + $0x1] sm:$0x1]
        %v345 = vlaneseq
        %v346 = vshrl.u32 %v345, 7
        %v347 = vsub.s32 0, %v346
        %v348 = vrot.slane %v344, %v347
        %v349 = vmul.f32 %v335, %v348
        %v350 = vpack.c.bf16 %v349, %v349
        %v352 = vrot.slane %v350, 4
        %vm354 = vcmask 523268
        %355 = vst.msk [vmem:[#allocation2] sm:$0xf0] %vm354, %v352
        %v356 = vld [vmem:[%s1 + $0x2] sm:$0x1]
        %v357 = vlaneseq
        %v358 = vshrl.u32 %v357, 7
        %v359 = vsub.s32 0, %v358
        %v360 = vrot.slane %v356, %v359
        %v361 = vmul.f32 %v335, %v360
        %v362 = vpack.c.bf16 %v361, %v361
        %363 = vst.msk [vmem:[#allocation2 + $0x8] sm:$0xf] %vm342, %v362
        %v364 = vld [vmem:[%s1 + $0x3] sm:$0x1]
        %v365 = vlaneseq
        %v366 = vshrl.u32 %v365, 7
        %v367 = vsub.s32 0, %v366
        %v368 = vrot.slane %v364, %v367
        %v369 = vmul.f32 %v335, %v368
        %v370 = vpack.c.bf16 %v369, %v369
        %v372 = vrot.slane %v370, 4
        %374 = vst.msk [vmem:[#allocation2 + $0x8] sm:$0xf0] %vm354, %v372
        %v375 = vld [vmem:[#allocation2] sm:$0xff]
        %v376 = vld [vmem:[#allocation2 + $0x8] sm:$0xff]
        %v385 = vunpack.c.l.b16 %v324
        %v386 = vunpack.c.l.b16 %v325
        %v387 = vunpack.c.l.b16 %v326
        %v388 = vunpack.c.l.b16 %v327
        %v389 = vunpack.c.l.b16 %v328
        %v390 = vunpack.c.l.b16 %v329
        %v391 = vunpack.c.l.b16 %v330
        %v392 = vunpack.c.l.b16 %v331
        %v393 = vpack.c.b16 %v386, %v385
        %v394 = vpack.c.b16 %v388, %v387
        %v395 = vpack.c.b16 %v390, %v389
        %v396 = vpack.c.b16 %v392, %v391
        %vm401 = vcmask 523264
        %v403 = vsel %vm401, %v375, 0
        %v406 = vsel %vm401, %v376, 0
        %408 = vmatprep.subr.bf16.mxu0 0
        %409 = vmatpush1.bf16.msra.mxu0 %v393
        %410 = vmatprep.subr.bf16.mxu0 0
        %411 = vmatpush1.bf16.msra.mxu0 %v394
        %412 = vmatprep.subr.bf16.mxu0 0
        %413 = vmatpush1.bf16.msra.mxu0 %v395
        %414 = vmatprep.subr.bf16.mxu0 0
        %415 = vmatpush1.bf16.msra.mxu0 %v396
        %416 = vmatprep.subr.bf16.mxu0 0
        %417 = vmatpush1.bf16.msra.mxu0 0
        %418 = vmatprep.subr.bf16.mxu0 0
        %419 = vmatpush1.bf16.msra.mxu0 0
        %420 = vmatprep.subr.bf16.mxu0 0
        %421 = vmatpush1.bf16.msra.mxu0 0
        %422 = vmatprep.subr.bf16.mxu0 0
        %423 = vmatpush1.bf16.msra.mxu0 0
        %424 = vmatprep.subr.bf16.mxu0 0
        %425 = vmatpush1.bf16.msra.mxu0 0
        %426 = vmatprep.subr.bf16.mxu0 0
        %427 = vmatpush1.bf16.msra.mxu0 0
        %428 = vmatprep.subr.bf16.mxu0 0
        %429 = vmatpush1.bf16.msra.mxu0 0
        %430 = vmatprep.subr.bf16.mxu0 0
        %431 = vmatpush1.bf16.msra.mxu0 0
        %432 = vmatprep.subr.bf16.mxu0 0
        %433 = vmatpush1.bf16.msra.mxu0 0
        %434 = vmatprep.subr.bf16.mxu0 0
        %435 = vmatpush1.bf16.msra.mxu0 0
        %436 = vmatprep.subr.bf16.mxu0 0
        %437 = vmatpush1.bf16.msra.mxu0 0
        %438 = vmatprep.subr.bf16.mxu0 0
        %439 = vmatpush1.bf16.msra.mxu0 0
        %440 = vmatprep.mubr.bf16.mxu0 0
        %441 = vmatmul.mubr.bf16.gmra.mrb[0].mxu0 %v403
        %v442 = vpop.f32.mrb[0].mxu0
        %v443 = vadd.f32 0.0, %v442
        %v444 = vpop.f32.mrb[0].mxu0
        %v445 = vpop.f32.mrb[0].mxu0
        %v446 = vadd.f32 0.0, %v445
        %v447 = vpop.f32.mrb[0].mxu0
        %448 = vmatprep.mubr.bf16.mxu0 0
        %449 = vmatmul.mubr.bf16.gmra.mrb[0].mxu0 %v406
        %v450 = vpop.f32.mrb[0].mxu0
        %v451 = vadd.f32 0.0, %v450
        %v452 = vpop.f32.mrb[0].mxu0
        %v453 = vpop.f32.mrb[0].mxu0
        %v454 = vadd.f32 0.0, %v453
        %v455 = vpop.f32.mrb[0].mxu0
        %456 = vdwg.mxu0
        %vm457 = vcmask 64512
        %v458 = vsel %vm457, %v443, -inf
        %459 = vmax.xlane.f32.xlu0 %v458
        %v460 = vpop.xlane.xlu0 %459
        %v461 = vsel %vm457, %v446, -inf
        %462 = vmax.xlane.f32.xlu0 %v461
        %v463 = vpop.xlane.xlu0 %462
        %v464 = vsel %vm457, %v451, -inf
        %465 = vmax.xlane.f32.xlu0 %v464
        %v466 = vpop.xlane.xlu0 %465
        %v467 = vsel %vm457, %v454, -inf
        %468 = vmax.xlane.f32.xlu0 %v467
        %v469 = vpop.xlane.xlu0 %468
        %v470 = vsub.f32 %v443, %v460
        %v471 = vsub.f32 %v446, %v463
        %v472 = vsub.f32 %v451, %v466
        %v473 = vsub.f32 %v454, %v469
        %v474 = vmul.f32 %v470, 1.442695
        %v475 = vpow.pop %v474
        %v476 = vmul.f32 %v471, 1.442695
        %v477 = vpow.pop %v476
        %v478 = vmul.f32 %v472, 1.442695
        %v479 = vpow.pop %v478
        %v480 = vmul.f32 %v473, 1.442695
        %v481 = vpow.pop %v480
        %v482 = vsel %vm457, %v475, 0.0
        %483 = vadd.xlane.f32.xlu0 %v482
        %v484 = vpop.xlane.xlu0 %483
        %v485 = vsel %vm457, %v477, 0.0
        %486 = vadd.xlane.f32.xlu0 %v485
        %v487 = vpop.xlane.xlu0 %486
        %v488 = vsel %vm457, %v479, 0.0
        %489 = vadd.xlane.f32.xlu0 %v488
        %v490 = vpop.xlane.xlu0 %489
        %v491 = vsel %vm457, %v481, 0.0
        %492 = vadd.xlane.f32.xlu0 %v491
        %v493 = vpop.xlane.xlu0 %492
        %v494 = vpack.c.bf16 %v477, %v475
        %v495 = vpack.c.bf16 %v481, %v479
        %v496 = vrcp.pop %v484
        %v497 = vrcp.pop %v487
        %v498 = vrcp.pop %v490
        %v499 = vrcp.pop %v493
        %v501 = vsel %vm457, %v494, 0
        %v504 = vsel %vm457, %v495, 0
        %vm506 = vcmask 1043456
        %v508 = vsel %vm506, %v332, 0
        %510 = vmatprep.subr.bf16.mxu0 0
        %511 = vmatpush1.bf16.msra.mxu0 %v508
        %512 = vmatprep.subr.bf16.mxu0 0
        %513 = vmatpush1.bf16.msra.mxu0 0
        %514 = vmatprep.subr.bf16.mxu0 0
        %515 = vmatpush1.bf16.msra.mxu0 0
        %516 = vmatprep.subr.bf16.mxu0 0
        %517 = vmatpush1.bf16.msra.mxu0 0
        %518 = vmatprep.subr.bf16.mxu0 0
        %519 = vmatpush1.bf16.msra.mxu0 0
        %520 = vmatprep.subr.bf16.mxu0 0
        %521 = vmatpush1.bf16.msra.mxu0 0
        %522 = vmatprep.subr.bf16.mxu0 0
        %523 = vmatpush1.bf16.msra.mxu0 0
        %524 = vmatprep.subr.bf16.mxu0 0
        %525 = vmatpush1.bf16.msra.mxu0 0
        %526 = vmatprep.subr.bf16.mxu0 0
        %527 = vmatpush1.bf16.msra.mxu0 0
        %528 = vmatprep.subr.bf16.mxu0 0
        %529 = vmatpush1.bf16.msra.mxu0 0
        %530 = vmatprep.subr.bf16.mxu0 0
        %531 = vmatpush1.bf16.msra.mxu0 0
        %532 = vmatprep.subr.bf16.mxu0 0
        %533 = vmatpush1.bf16.msra.mxu0 0
        %534 = vmatprep.subr.bf16.mxu0 0
        %535 = vmatpush1.bf16.msra.mxu0 0
        %536 = vmatprep.subr.bf16.mxu0 0
        %537 = vmatpush1.bf16.msra.mxu0 0
        %538 = vmatprep.subr.bf16.mxu0 0
        %539 = vmatpush1.bf16.msra.mxu0 0
        %540 = vmatprep.subr.bf16.mxu0 0
        %541 = vmatpush1.bf16.msra.mxu0 0
        %542 = vmatprep.mubr.bf16.mxu0 0
        %543 = vmatmul.mubr.bf16.gmra.mrb[0].mxu0 %v501
        %v544 = vpop.f32.mrb[0].mxu0
        %v545 = vadd.f32 0.0, %v544
        %v546 = vpop.f32.mrb[0].mxu0
        %v547 = vpop.f32.mrb[0].mxu0
        %v548 = vadd.f32 0.0, %v547
        %v549 = vpop.f32.mrb[0].mxu0
        %550 = vmatprep.mubr.bf16.mxu0 0
        %551 = vmatmul.mubr.bf16.gmra.mrb[0].mxu0 %v504
        %v552 = vpop.f32.mrb[0].mxu0
        %v553 = vadd.f32 0.0, %v552
        %v554 = vpop.f32.mrb[0].mxu0
        %v555 = vpop.f32.mrb[0].mxu0
        %v556 = vadd.f32 0.0, %v555
        %v557 = vpop.f32.mrb[0].mxu0
        %558 = vdwg.mxu0
        %v559 = vld [vmem:[%s4] sm:$0x1]
        %v560 = vlaneseq
        %v561 = vshrl.u32 %v560, 7
        %v562 = vsub.s32 0, %v561
        %v563 = vrot.slane %v559, %v562
        %v564 = vmul.f32 %v496, %v563
        %v565 = vmul.f32 %v545, %v564
        %v566 = vadd.f32 %v565, 0.0
        %v567 = vld [vmem:[%s4 + $0x1] sm:$0x1]
        %v568 = vlaneseq
        %v569 = vshrl.u32 %v568, 7
        %v570 = vsub.s32 0, %v569
        %v571 = vrot.slane %v567, %v570
        %v572 = vmul.f32 %v497, %v571
        %v573 = vmul.f32 %v548, %v572
        %v574 = vadd.f32 %v566, %v573
        %v575 = vld [vmem:[%s4 + $0x2] sm:$0x1]
        %v576 = vlaneseq
        %v577 = vshrl.u32 %v576, 7
        %v578 = vsub.s32 0, %v577
        %v579 = vrot.slane %v575, %v578
        %v580 = vmul.f32 %v498, %v579
        %v581 = vmul.f32 %v553, %v580
        %v582 = vadd.f32 %v574, %v581
        %v583 = vld [vmem:[%s4 + $0x3] sm:$0x1]
        %v584 = vlaneseq
        %v585 = vshrl.u32 %v584, 7
        %v586 = vsub.s32 0, %v585
        %v587 = vrot.slane %v583, %v586
        %v588 = vmul.f32 %v499, %v587
        %v589 = vmul.f32 %v556, %v588
        %v590 = vadd.f32 %v582, %v589
        %v591 = vld [vmem:[%s1 + $0x4] sm:$0x1]
        %v592 = vlaneseq
        %v593 = vshrl.u32 %v592, 7
        %v594 = vsub.s32 0, %v593
        %v595 = vrot.slane %v591, %v594
        %v596 = vmul.f32 %v335, %v595
        %v597 = vpack.c.bf16 %v596, %v596
        %598 = vst.msk [vmem:[#allocation2] sm:$0xf] %vm342, %v597
        %v599 = vld [vmem:[%s1 + $0x5] sm:$0x1]
        %v600 = vlaneseq
        %v601 = vshrl.u32 %v600, 7
        %v602 = vsub.s32 0, %v601
        %v603 = vrot.slane %v599, %v602
        %v604 = vmul.f32 %v335, %v603
        %v605 = vpack.c.bf16 %v604, %v604
        %v607 = vrot.slane %v605, 4
        %609 = vst.msk [vmem:[#allocation2] sm:$0xf0] %vm354, %v607
        %v610 = vld [vmem:[%s1 + $0x6] sm:$0x1]
        %v611 = vlaneseq
        %v612 = vshrl.u32 %v611, 7
        %v613 = vsub.s32 0, %v612
        %v614 = vrot.slane %v610, %v613
        %v615 = vmul.f32 %v335, %v614
        %v616 = vpack.c.bf16 %v615, %v615
        %617 = vst.msk [vmem:[#allocation2 + $0x8] sm:$0xf] %vm342, %v616
        %v618 = vld [vmem:[%s1 + $0x7] sm:$0x1]
        %v619 = vlaneseq
        %v620 = vshrl.u32 %v619, 7
        %v621 = vsub.s32 0, %v620
        %v622 = vrot.slane %v618, %v621
        %v623 = vmul.f32 %v335, %v622
        %v624 = vpack.c.bf16 %v623, %v623
        %v626 = vrot.slane %v624, 4
        %628 = vst.msk [vmem:[#allocation2 + $0x8] sm:$0xf0] %vm354, %v626
        %v629 = vld [vmem:[#allocation2] sm:$0xff]
        %v630 = vld [vmem:[#allocation2 + $0x8] sm:$0xff]
        %v632 = vsel %vm401, %v629, 0
        %v635 = vsel %vm401, %v630, 0
        %637 = vmatprep.subr.bf16.mxu0 0
        %638 = vmatpush1.bf16.msra.mxu0 %v393
        %639 = vmatprep.subr.bf16.mxu0 0
        %640 = vmatpush1.bf16.msra.mxu0 %v394
        %641 = vmatprep.subr.bf16.mxu0 0
        %642 = vmatpush1.bf16.msra.mxu0 %v395
        %643 = vmatprep.subr.bf16.mxu0 0
        %644 = vmatpush1.bf16.msra.mxu0 %v396
        %645 = vmatprep.subr.bf16.mxu0 0
        %646 = vmatpush1.bf16.msra.mxu0 0
        %647 = vmatprep.subr.bf16.mxu0 0
        %648 = vmatpush1.bf16.msra.mxu0 0
        %649 = vmatprep.subr.bf16.mxu0 0
        %650 = vmatpush1.bf16.msra.mxu0 0
        %651 = vmatprep.subr.bf16.mxu0 0
        %652 = vmatpush1.bf16.msra.mxu0 0
        %653 = vmatprep.subr.bf16.mxu0 0
        %654 = vmatpush1.bf16.msra.mxu0 0
        %655 = vmatprep.subr.bf16.mxu0 0
        %656 = vmatpush1.bf16.msra.mxu0 0
        %657 = vmatprep.subr.bf16.mxu0 0
        %658 = vmatpush1.bf16.msra.mxu0 0
        %659 = vmatprep.subr.bf16.mxu0 0
        %660 = vmatpush1.bf16.msra.mxu0 0
        %661 = vmatprep.subr.bf16.mxu0 0
        %662 = vmatpush1.bf16.msra.mxu0 0
        %663 = vmatprep.subr.bf16.mxu0 0
        %664 = vmatpush1.bf16.msra.mxu0 0
        %665 = vmatprep.subr.bf16.mxu0 0
        %666 = vmatpush1.bf16.msra.mxu0 0
        %667 = vmatprep.subr.bf16.mxu0 0
        %668 = vmatpush1.bf16.msra.mxu0 0
        %669 = vmatprep.mubr.bf16.mxu0 0
        %670 = vmatmul.mubr.bf16.gmra.mrb[0].mxu0 %v632
        %v671 = vpop.f32.mrb[0].mxu0
        %v672 = vadd.f32 0.0, %v671
        %v673 = vpop.f32.mrb[0].mxu0
        %v674 = vpop.f32.mrb[0].mxu0
        %v675 = vadd.f32 0.0, %v674
        %v676 = vpop.f32.mrb[0].mxu0
        %677 = vmatprep.mubr.bf16.mxu0 0
        %678 = vmatmul.mubr.bf16.gmra.mrb[0].mxu0 %v635
        %v679 = vpop.f32.mrb[0].mxu0
        %v680 = vadd.f32 0.0, %v679
        %v681 = vpop.f32.mrb[0].mxu0
        %v682 = vpop.f32.mrb[0].mxu0
        %v683 = vadd.f32 0.0, %v682
        %v684 = vpop.f32.mrb[0].mxu0
        %685 = vdwg.mxu0
        %v686 = vsel %vm457, %v672, -inf
        %687 = vmax.xlane.f32.xlu0 %v686
        %v688 = vpop.xlane.xlu0 %687
        %v689 = vsel %vm457, %v675, -inf
        %690 = vmax.xlane.f32.xlu0 %v689
        %v691 = vpop.xlane.xlu0 %690
        %v692 = vsel %vm457, %v680, -inf
        %693 = vmax.xlane.f32.xlu0 %v692
        %v694 = vpop.xlane.xlu0 %693
        %v695 = vsel %vm457, %v683, -inf
        %696 = vmax.xlane.f32.xlu0 %v695
        %v697 = vpop.xlane.xlu0 %696
        %v698 = vsub.f32 %v672, %v688
        %v699 = vsub.f32 %v675, %v691
        %v700 = vsub.f32 %v680, %v694
        %v701 = vsub.f32 %v683, %v697
        %v702 = vmul.f32 %v698, 1.442695
        %v703 = vpow.pop %v702
        %v704 = vmul.f32 %v699, 1.442695
        %v705 = vpow.pop %v704
        %v706 = vmul.f32 %v700, 1.442695
        %v707 = vpow.pop %v706
        %v708 = vmul.f32 %v701, 1.442695
        %v709 = vpow.pop %v708
        %v710 = vsel %vm457, %v703, 0.0
        %711 = vadd.xlane.f32.xlu0 %v710
        %v712 = vpop.xlane.xlu0 %711
        %v713 = vsel %vm457, %v705, 0.0
        %714 = vadd.xlane.f32.xlu0 %v713
        %v715 = vpop.xlane.xlu0 %714
        %v716 = vsel %vm457, %v707, 0.0
        %717 = vadd.xlane.f32.xlu0 %v716
        %v718 = vpop.xlane.xlu0 %717
        %v719 = vsel %vm457, %v709, 0.0
        %720 = vadd.xlane.f32.xlu0 %v719
        %v721 = vpop.xlane.xlu0 %720
        %v722 = vpack.c.bf16 %v705, %v703
        %v723 = vpack.c.bf16 %v709, %v707
        %v724 = vrcp.pop %v712
        %v725 = vrcp.pop %v715
        %v726 = vrcp.pop %v718
        %v727 = vrcp.pop %v721
        %v729 = vsel %vm457, %v722, 0
        %v732 = vsel %vm457, %v723, 0
        %734 = vmatprep.subr.bf16.mxu0 0
        %735 = vmatpush1.bf16.msra.mxu0 %v508
        %736 = vmatprep.subr.bf16.mxu0 0
        %737 = vmatpush1.bf16.msra.mxu0 0
        %738 = vmatprep.subr.bf16.mxu0 0
        %739 = vmatpush1.bf16.msra.mxu0 0
        %740 = vmatprep.subr.bf16.mxu0 0
        %741 = vmatpush1.bf16.msra.mxu0 0
        %742 = vmatprep.subr.bf16.mxu0 0
        %743 = vmatpush1.bf16.msra.mxu0 0
        %744 = vmatprep.subr.bf16.mxu0 0
        %745 = vmatpush1.bf16.msra.mxu0 0
        %746 = vmatprep.subr.bf16.mxu0 0
        %747 = vmatpush1.bf16.msra.mxu0 0
        %748 = vmatprep.subr.bf16.mxu0 0
        %749 = vmatpush1.bf16.msra.mxu0 0
        %750 = vmatprep.subr.bf16.mxu0 0
        %751 = vmatpush1.bf16.msra.mxu0 0
        %752 = vmatprep.subr.bf16.mxu0 0
        %753 = vmatpush1.bf16.msra.mxu0 0
        %754 = vmatprep.subr.bf16.mxu0 0
        %755 = vmatpush1.bf16.msra.mxu0 0
        %756 = vmatprep.subr.bf16.mxu0 0
        %757 = vmatpush1.bf16.msra.mxu0 0
        %758 = vmatprep.subr.bf16.mxu0 0
        %759 = vmatpush1.bf16.msra.mxu0 0
        %760 = vmatprep.subr.bf16.mxu0 0
        %761 = vmatpush1.bf16.msra.mxu0 0
        %762 = vmatprep.subr.bf16.mxu0 0
        %763 = vmatpush1.bf16.msra.mxu0 0
        %764 = vmatprep.subr.bf16.mxu0 0
        %765 = vmatpush1.bf16.msra.mxu0 0
        %766 = vmatprep.mubr.bf16.mxu0 0
        %767 = vmatmul.mubr.bf16.gmra.mrb[0].mxu0 %v729
        %v768 = vpop.f32.mrb[0].mxu0
        %v769 = vadd.f32 0.0, %v768
        %v770 = vpop.f32.mrb[0].mxu0
        %v771 = vpop.f32.mrb[0].mxu0
        %v772 = vadd.f32 0.0, %v771
        %v773 = vpop.f32.mrb[0].mxu0
        %774 = vmatprep.mubr.bf16.mxu0 0
        %775 = vmatmul.mubr.bf16.gmra.mrb[0].mxu0 %v732
        %v776 = vpop.f32.mrb[0].mxu0
        %v777 = vadd.f32 0.0, %v776
        %v778 = vpop.f32.mrb[0].mxu0
        %v779 = vpop.f32.mrb[0].mxu0
        %v780 = vadd.f32 0.0, %v779
        %v781 = vpop.f32.mrb[0].mxu0
        %782 = vdwg.mxu0
        %v783 = vld [vmem:[%s4 + $0x4] sm:$0x1]
        %v784 = vlaneseq
        %v785 = vshrl.u32 %v784, 7
        %v786 = vsub.s32 0, %v785
        %v787 = vrot.slane %v783, %v786
        %v788 = vmul.f32 %v724, %v787
        %v789 = vmul.f32 %v769, %v788
        %v790 = vadd.f32 %v590, %v789
        %v791 = vld [vmem:[%s4 + $0x5] sm:$0x1]
        %v792 = vlaneseq
        %v793 = vshrl.u32 %v792, 7
        %v794 = vsub.s32 0, %v793
        %v795 = vrot.slane %v791, %v794
        %v796 = vmul.f32 %v725, %v795
        %v797 = vmul.f32 %v772, %v796
        %v798 = vadd.f32 %v790, %v797
        %v799 = vld [vmem:[%s4 + $0x6] sm:$0x1]
        %v800 = vlaneseq
        %v801 = vshrl.u32 %v800, 7
        %v802 = vsub.s32 0, %v801
        %v803 = vrot.slane %v799, %v802
        %v804 = vmul.f32 %v726, %v803
        %v805 = vmul.f32 %v777, %v804
        %v806 = vadd.f32 %v798, %v805
        %v807 = vld [vmem:[%s4 + $0x7] sm:$0x1]
        %v808 = vlaneseq
        %v809 = vshrl.u32 %v808, 7
        %v810 = vsub.s32 0, %v809
        %v811 = vrot.slane %v807, %v810
        %v812 = vmul.f32 %v727, %v811
        %v813 = vmul.f32 %v780, %v812
        %v814 = vadd.f32 %v806, %v813
        %v815 = vld [vmem:[%s322] sm:$0x1]
        %v817 = vlaneseq
        %v818 = vshrl.u32 %v817, 7
        %v819 = vsub.s32 0, %v818
        %v820 = vrot.slane %v815, %v819
        %v822 = vadd.f32 %v814, %v820
        %823 = vst [vmem:[%s303] sm:$0xff] %v822
        %s824 = sand.u32 %s190, 1
        %s825 = scalar_lea.sflag [#allocation4], %s824
        %s826 = sand.u32 %s190, 1
        %s827 = smul.addr %s826, 8
        %s828 = scalar_lea.vmem [#allocation3], %s827
        // Predicated region
        $region45: #{tpu_custom_call.1} parent=43 // pred_check
          %p829 = pneg %p200
        $region46: #{tpu_custom_call.1} parent=43 // pred_check_branch
          %831 = sbr.rel (%p829) target = $region48
        $region47: #{tpu_custom_call.1} parent=43 // pred_region
          %s833 = ssub.s32 128, 128
          %834 = vsyncadd %s825, %s833
          %s835 = sadd.s32 %s25, %s24
          %s836 = smul.addr %s835, 128
          %s837 = scalar_lea.hbm %s6, %s836
          %s839 = sshll.u32 %s828, 4
          %s840 = int_to_ptr.vmem [resolvable:$true] %s839
          %842 = dma.vmem_to_hbm [thread:$0]  %s840, 128, %s837, %s825
        $region48: #{tpu_custom_call.1} parent=43 // pred_fallthru
          _
      $region44: #{tpu_custom_call.1} parent=5 // pred_fallthru
        _
      %p843 = scmp.le.s32.totalorder 2, %s15
      // Predicated region
      $region49: #{tpu_custom_call.1} parent=5 // pred_check
        %p844 = pneg %p843
      $region50: #{tpu_custom_call.1} parent=5 // pred_check_branch
        %846 = sbr.rel (%p844) target = $region52
      $region51: #{tpu_custom_call.1} parent=5 // pred_region
        %s847 = ssub.s32 %s15, 2
        // Predicated region
        $region53: #{tpu_custom_call.1} parent=51 // pred_check
          %p848 = pneg %p206
        $region54: #{tpu_custom_call.1} parent=51 // pred_check_branch
          %850 = sbr.rel (%p848) target = $region56
        $region55: #{tpu_custom_call.1} parent=51 // pred_region
          %s851 = sand.u32 %s191, 1
          %s852 = scalar_lea.sflag [#allocation4], %s851
          %s853 = sand.u32 %s191, 1
          %s854 = smul.addr %s853, 8
          %s855 = scalar_lea.vmem [#allocation3], %s854
          %856 = dma.done %s852, 128
        $region56: #{tpu_custom_call.1} parent=51 // pred_fallthru
          _
      $region52: #{tpu_custom_call.1} parent=5 // pred_fallthru
        _
    $region6: #{tpu_custom_call.1} parent=1 // loop_footer
      %s19 = sadd.s32 1, %s15
    $region7: #{tpu_custom_call.1} parent=1 // loop_footer_branch
      %14 = sbr.rel target = $region3
    $region8: #{tpu_custom_call.1} parent=1 // loop_exit
      _
    %857 = vsyncpa [#allocation4], 1
    %s858 = scalar_lea.sflag [#allocation4], 1
    %859 = vsyncpa %s858, 1

</llo_original>
